<compile_context>
chip_gen: v6e
topology: v6e:2x2x1
jax: 0.10.0
libtpu: 0.0.40
codegen_flags: <defaults>
</compile_context>

<pallas_src>
import functools

import jax
import jax.numpy as jnp
from jax.experimental import pallas as pl
from jax.experimental.pallas import tpu as pltpu


def _round_up(n, m):
    return ((n + m - 1) // m) * m


def _softplus(x):
    # softplus(x) = log(1 + exp(x)), numerically stable form.
    return jnp.logaddexp(x, 0.0)


def _tail(out2, eps, x_dim, eps_jitter):
    """Split fused head output, apply safe_softplus and reparameterization."""
    mu = out2[:, :x_dim]
    raw = out2[:, x_dim:]
    var = _softplus(raw) + eps_jitter            # safe_softplus (eps inside)
    x_t = eps * jnp.sqrt(var) + mu               # reparameterized sample
    return jnp.concatenate([x_t, mu, var], axis=1)   # [block_m, 3*x_dim]


def _postnet_kernel_mf(hidden_ref, eps_ref, w_h_ref, b_ref, out_ref,
                       *, x_dim, eps_jitter):
    """mean-field variant (mf_flag=True).

    bd average, 0.5 scaling and mu/var head fusion are pre-folded into
    w_h ([(1+bd)*h_dim, 2*x_dim]) -> one MXU push per row block.
    """
    out2 = jnp.dot(hidden_ref[...], w_h_ref[...],
                   preferred_element_type=jnp.float32) + b_ref[...]
    out_ref[...] = _tail(out2, eps_ref[...].astype(jnp.float32),
                         x_dim, eps_jitter)


def _postnet_kernel_nonmf(hidden_ref, x_ref, eps_ref,
                          w_xh_ref, b_xh_ref, w_hx_ref, b_ref,
                          out_ref, *, x_dim, eps_jitter):
    """non-mean-field variant (mf_flag=False).

    h_comb = (tanh(x W_xh + b_xh) + 2 * hidden_avg) / 3 ; then fused mu/var head.
    The 1/3, 2/3, 0.5 scalings, bd stacking AND the two head matmuls are folded
    into the single K-stacked weight w_hx ([(1+bd)*h_dim + h_dim, 2*x_dim]):
        out2 = [hidden | tanh(x W_xh + b_xh)] @ w_hx + b
    """
    x_h = jnp.tanh(jnp.dot(x_ref[...], w_xh_ref[...],
                           preferred_element_type=jnp.float32) + b_xh_ref[...])
    h_full = jnp.concatenate([hidden_ref[...], x_h], axis=-1)
    out2 = jnp.dot(h_full, w_hx_ref[...],
                   preferred_element_type=jnp.float32) + b_ref[...]
    out_ref[...] = _tail(out2, eps_ref[...].astype(jnp.float32),
                         x_dim, eps_jitter)


def prepare_postnet_params(params, *, bd=True, mf_flag=True):
    """One-time parameter glue: transpose, fuse heads, fold averages/scalings.

    Returns a dict of pre-fused arrays ready to feed postnet_forward.
    """
    w_mu = jnp.asarray(params["w_mu"], jnp.float32).T       # [h_dim, x_dim]
    w_var = jnp.asarray(params["w_var"], jnp.float32).T     # [h_dim, x_dim]
    b_mu = jnp.asarray(params["b_mu"], jnp.float32)
    b_var = jnp.asarray(params["b_var"], jnp.float32)
    x_dim = w_mu.shape[1]

    # Fused mu/var head: [h_dim, 2*x_dim], [1, 2*x_dim]
    w_fused = jnp.concatenate([w_mu, w_var], axis=1)
    b_fused = jnp.concatenate([b_mu, b_var]).reshape(1, 2 * x_dim)

    # Fold the bd average (sum(1)/2) and, for non-mf, the 2/3 factor, into the
    # hidden-side weight, stacked along K so the kernel never lane-slices hidden.
    hidden_scale = 0.5 if mf_flag else (1.0 / 3.0)   # 0.5 * (2/3) = 1/3
    if bd:
        w_h = jnp.concatenate([w_fused, w_fused], axis=0) * hidden_scale
    else:
        w_h = w_fused * hidden_scale                  # [(1+bd)*h_dim, 2*x_dim]

    fused = {"b": b_fused, "x_dim": x_dim}

    if mf_flag:
        fused["w_h"] = w_h
    else:
        fused["w_xh"] = jnp.asarray(params["w_xh"], jnp.float32).T   # [x_dim, h_dim]
        fused["b_xh"] = jnp.asarray(params["b_xh"], jnp.float32).reshape(1, -1)
        w_x = w_fused * (1.0 / 3.0)                   # tanh-branch head weight
        # K-stacked single-head weight: [(1+bd)*h_dim + h_dim, 2*x_dim]
        fused["w_hx"] = jnp.concatenate([w_h, w_x], axis=0)
    return fused


def postnet_forward(x_t_1, hidden, fused_params, epsilon,
                    *, mf_flag=True, eps_jitter=1e-4, block_rows=256):
    """Pallas implementation of PostNet.forward, gridded over rows.

    x_t_1:  [rows, x_dim]            (rows may be batch or T*batch, flattened)
    hidden: [rows, (1+bd) * h_dim]
    epsilon:[rows, x_dim]            (the torch.randn sample, supplied externally)
    fused_params: output of prepare_postnet_params (computed once per model).
    Returns (x_t, mu, var), each [rows, x_dim] float32.
    """
    rows, x_dim = x_t_1.shape
    assert fused_params["x_dim"] == x_dim
    k_h = hidden.shape[1]

    # Row block: multiple of 8 sublanes, capped at block_rows (MXU-edge sized).
    block_m = min(_round_up(block_rows, 8), _round_up(rows, 8))
    rows_p = _round_up(rows, block_m)
    pad = rows_p - rows
    if pad:
        hidden = jnp.pad(hidden, ((0, pad), (0, 0)))
        epsilon = jnp.pad(epsilon, ((0, pad), (0, 0)))
        x_t_1 = jnp.pad(x_t_1, ((0, pad), (0, 0)))
    grid = (rows_p // block_m,)

    def row_spec(width):
        return pl.BlockSpec((block_m, width), lambda i: (i, 0))

    def resident_spec(arr):
        # Constant index_map -> weight block DMA'd once, stays resident in VMEM.
        return pl.BlockSpec(arr.shape, lambda i: (0, 0))

    if mf_flag:
        kernel = functools.partial(_postnet_kernel_mf,
                                   x_dim=x_dim, eps_jitter=eps_jitter)
        inputs = (hidden, epsilon, fused_params["w_h"], fused_params["b"])
        in_specs = [row_spec(k_h), row_spec(x_dim),
                    resident_spec(fused_params["w_h"]),
                    resident_spec(fused_params["b"])]
    else:
        kernel = functools.partial(_postnet_kernel_nonmf,
                                   x_dim=x_dim, eps_jitter=eps_jitter)
        inputs = (hidden, x_t_1, epsilon,
                  fused_params["w_xh"], fused_params["b_xh"],
                  fused_params["w_hx"], fused_params["b"])
        in_specs = [row_spec(k_h), row_spec(x_dim), row_spec(x_dim),
                    resident_spec(fused_params["w_xh"]),
                    resident_spec(fused_params["b_xh"]),
                    resident_spec(fused_params["w_hx"]),
                    resident_spec(fused_params["b"])]

    out = pl.pallas_call(
        kernel,
        out_shape=jax.ShapeDtypeStruct((rows_p, 3 * x_dim), jnp.float32),
        grid=grid,
        in_specs=in_specs,
        out_specs=pl.BlockSpec((block_m, 3 * x_dim), lambda i: (i, 0)),
        compiler_params=pltpu.CompilerParams(
            dimension_semantics=("parallel",)),   # uses both TCs on v7x
    )(*inputs)

    out = out[:rows]
    # Split the single stacked output into (x_t, mu, var) in the wrapper.
    x_t = out[:, :x_dim]
    mu = out[:, x_dim:2 * x_dim]
    var = out[:, 2 * x_dim:]
    return x_t, mu, var


def postnet_reference(x_t_1, hidden, params, epsilon,
                      *, bd=True, mf_flag=True, eps_jitter=1e-4):
    """Plain-JAX reference mirroring the PyTorch forward exactly (un-fused)."""
    B = hidden.shape[0]
    h_tmp = hidden.reshape(B, 1 + int(bd), -1)
    h_comb = h_tmp.sum(1) / 2.0
    if not mf_flag:
        h_comb = (jnp.tanh(x_t_1 @ params["w_xh"].T + params["b_xh"])
                  + 2.0 * h_comb) / 3.0
    mu = h_comb @ params["w_mu"].T + params["b_mu"]
    var = jnp.logaddexp(h_comb @ params["w_var"].T + params["b_var"], 0.0) + eps_jitter
    x_t = epsilon * jnp.sqrt(var) + mu
    return x_t, mu, var


if __name__ == "__main__":
    # Small shapes consistent with the module: batch=8, x_dim=4, h_dim=32, bd=True.
    B, x_dim, h_dim = 8, 4, 32
    bd = True
    T = 64                               # time steps for the batched-grid test

    key = jax.random.PRNGKey(0)
    keys = jax.random.split(key, 12)

    scale = 0.1
    params = {
        "w_mu": scale * jax.random.normal(keys[3], (x_dim, h_dim), jnp.float32),
        "b_mu": scale * jax.random.normal(keys[4], (x_dim,), jnp.float32),
        "w_var": scale * jax.random.normal(keys[5], (x_dim, h_dim), jnp.float32),
        "b_var": scale * jax.random.normal(keys[6], (x_dim,), jnp.float32),
        # only used when mf_flag=False
        "w_xh": scale * jax.random.normal(keys[7], (h_dim, x_dim), jnp.float32),
        "b_xh": scale * jax.random.normal(keys[8], (h_dim,), jnp.float32),
    }

    # Case 1: single small forward call (rows = 8).
    x_small = jax.random.normal(keys[0], (B, x_dim), jnp.float32)
    h_small = jax.random.normal(keys[1], (B, (1 + int(bd)) * h_dim), jnp.float32)
    e_small = jax.random.normal(keys[2], (B, x_dim), jnp.float32)

    # Case 2: T time steps batched into one gridded pallas_call (rows = T*B = 512).
    x_big = jax.random.normal(keys[9], (T * B, x_dim), jnp.float32)
    h_big = jax.random.normal(keys[10], (T * B, (1 + int(bd)) * h_dim), jnp.float32)
    e_big = jax.random.normal(keys[11], (T * B, x_dim), jnp.float32)

    ok = True
    for mf_flag in (True, False):
        # Parameter glue hoisted: runs once per model, not per forward call.
        fused = prepare_postnet_params(params, bd=bd, mf_flag=mf_flag)
        for (x_in, h_in, e_in) in ((x_small, h_small, e_small),
                                   (x_big, h_big, e_big)):
            out = postnet_forward(x_in, h_in, fused, e_in, mf_flag=mf_flag)
            out = jax.block_until_ready(out)
            ref = postnet_reference(x_in, h_in, params, e_in,
                                    bd=bd, mf_flag=mf_flag)
            for name, o, r in zip(("x_t", "mu", "var"), out, ref):
                if not jnp.allclose(o, r, atol=1e-5, rtol=1e-5):
                    ok = False
                    print(f"MISMATCH mf_flag={mf_flag} rows={x_in.shape[0]} "
                          f"{name}: max err {jnp.max(jnp.abs(o - r))}")

    if ok:
        print("KERNEL_OK")
</pallas_src>

<mosaic_0001>
module attributes {stable_mosaic.version = 11 : i64} {
  func.func @_postnet_kernel_mf(%arg0: i32, %arg1: memref<8x64xf32, #tpu.memory_space<vmem>>, %arg2: memref<8x4xf32, #tpu.memory_space<vmem>>, %arg3: memref<64x8xf32, #tpu.memory_space<vmem>>, %arg4: memref<1x8xf32, #tpu.memory_space<vmem>>, %arg5: memref<8x12xf32, #tpu.memory_space<vmem>>) attributes {dimension_semantics = [#tpu.dimension_semantics<parallel>], iteration_bounds = array<i64: 1>, scalar_prefetch = 0 : i64, scratch_operands = 0 : i64, tpu.core_type = #tpu.core_type<tc>, window_params = [{transform_indices = @transform_0, window_bounds = array<i64: 8, 64>}, {transform_indices = @transform_1, window_bounds = array<i64: 8, 4>}, {pipeline_mode = #tpu.pipeline_mode<synchronous>, transform_indices = @transform_2, window_bounds = array<i64: 64, 8>}, {pipeline_mode = #tpu.pipeline_mode<synchronous>, transform_indices = @transform_3, window_bounds = array<i64: 1, 8>}, {transform_indices = @transform_4, window_bounds = array<i64: 8, 12>}]} {
    %c0 = arith.constant 0 : index
    %c0_0 = arith.constant 0 : index
    %0 = vector.load %arg1[%c0, %c0_0] : memref<8x64xf32, #tpu.memory_space<vmem>>, vector<8x64xf32>
    %c0_1 = arith.constant 0 : index
    %c0_2 = arith.constant 0 : index
    %1 = vector.load %arg3[%c0_1, %c0_2] : memref<64x8xf32, #tpu.memory_space<vmem>>, vector<64x8xf32>
    %cst = arith.constant dense<0.000000e+00> : vector<8x8xf32>
    %2 = tpu.matmul %0, %1, %cst {dimension_numbers = #tpu.dot_dimension_numbers<[1], [0], [0], [1], [0, 0, 1, 1], [], []>} : vector<8x64xf32>, vector<64x8xf32>, vector<8x8xf32> -> vector<8x8xf32>
    %c0_3 = arith.constant 0 : index
    %c0_4 = arith.constant 0 : index
    %3 = vector.load %arg4[%c0_3, %c0_4] : memref<1x8xf32, #tpu.memory_space<vmem>>, vector<1x8xf32>
    %4 = vector.broadcast %3 : vector<1x8xf32> to vector<8x8xf32>
    %5 = arith.addf %2, %4 : vector<8x8xf32>
    %c0_5 = arith.constant 0 : index
    %c0_6 = arith.constant 0 : index
    %6 = vector.load %arg2[%c0_5, %c0_6] : memref<8x4xf32, #tpu.memory_space<vmem>>, vector<8x4xf32>
    %7 = vector.extract_strided_slice %5 {offsets = [0, 0], sizes = [8, 4], strides = [1, 1]} : vector<8x8xf32> to vector<8x4xf32>
    %8 = vector.extract_strided_slice %5 {offsets = [0, 4], sizes = [8, 4], strides = [1, 1]} : vector<8x8xf32> to vector<8x4xf32>
    %cst_7 = arith.constant 0.000000e+00 : f32
    %9 = vector.broadcast %cst_7 : f32 to vector<8x4xf32>
    %10 = arith.maximumf %8, %9 : vector<8x4xf32>
    %11 = vector.broadcast %cst_7 : f32 to vector<8x4xf32>
    %12 = arith.subf %8, %11 : vector<8x4xf32>
    %13 = arith.cmpf one, %12, %12 : vector<8x4xf32>
    %14 = vector.broadcast %cst_7 : f32 to vector<8x4xf32>
    %15 = arith.addf %8, %14 : vector<8x4xf32>
    %16 = math.absf %12 : vector<8x4xf32>
    %cst_8 = arith.constant 0.000000e+00 : f32
    %17 = vector.broadcast %cst_8 : f32 to vector<8x4xf32>
    %18 = arith.subf %17, %16 : vector<8x4xf32>
    %19 = math.exp %18 : vector<8x4xf32>
    %20 = math.log1p %19 : vector<8x4xf32>
    %21 = arith.addf %10, %20 : vector<8x4xf32>
    %22 = arith.select %13, %15, %21 : vector<8x4xi1>, vector<8x4xf32>
    %cst_9 = arith.constant 9.99999974E-5 : f32
    %23 = vector.broadcast %cst_9 : f32 to vector<8x4xf32>
    %24 = arith.addf %22, %23 : vector<8x4xf32>
    %25 = math.sqrt %24 : vector<8x4xf32>
    %26 = arith.mulf %6, %25 : vector<8x4xf32>
    %27 = arith.addf %26, %7 : vector<8x4xf32>
    %28 = tpu.concatenate %27, %7, %24 in 1 : vector<8x4xf32>, vector<8x4xf32>, vector<8x4xf32> -> vector<8x12xf32>
    %c0_10 = arith.constant 0 : index
    %c0_11 = arith.constant 0 : index
    %29 = vector.load %arg5[%c0_10, %c0_11] : memref<8x12xf32, #tpu.memory_space<vmem>>, vector<8x12xf32>
    tpu.vector_store %arg5[%c0_10, %c0_11], %28 {strides = array<i32>} : memref<8x12xf32, #tpu.memory_space<vmem>>, vector<8x12xf32>,
    return
  }
  func.func @transform_0(%arg0: i32) -> (i32, i32) {
    %c0_i32 = arith.constant 0 : i32
    %c0_i32_0 = arith.constant 0 : i32
    return %arg0, %c0_i32 : i32, i32
  }
  func.func @transform_1(%arg0: i32) -> (i32, i32) {
    %c0_i32 = arith.constant 0 : i32
    %c0_i32_0 = arith.constant 0 : i32
    return %arg0, %c0_i32 : i32, i32
  }
  func.func @transform_2(%arg0: i32) -> (i32, i32) {
    %c0_i32 = arith.constant 0 : i32
    %c0_i32_0 = arith.constant 0 : i32
    %c0_i32_1 = arith.constant 0 : i32
    return %c0_i32, %c0_i32_0 : i32, i32
  }
  func.func @transform_3(%arg0: i32) -> (i32, i32) {
    %c0_i32 = arith.constant 0 : i32
    %c0_i32_0 = arith.constant 0 : i32
    %c0_i32_1 = arith.constant 0 : i32
    return %c0_i32, %c0_i32_0 : i32, i32
  }
  func.func @transform_4(%arg0: i32) -> (i32, i32) {
    %c0_i32 = arith.constant 0 : i32
    %c0_i32_0 = arith.constant 0 : i32
    return %arg0, %c0_i32 : i32, i32
  }
}

</mosaic_0001>

<llo_original>
// kernel: tpu_custom_call.1
$region0: #{tpu_custom_call.1}
  #allocation0 [shape = 'u32[]', space=smem, size = 0x4, offset = 0x4, fixed_abs, tag = 'smem constant byte address 0x4 - core index']
  #allocation1 [shape = 'u32[144,128]{1,0:T(1,128)}', space=vmem, size = 0x12000, scoped, tag = 'internal scratch']
  %s0 = inlined_call_operand.vmem [shape: f32[8,64], index: 0, kind: input, shape index: {}]
  %s1 = inlined_call_operand.vmem [shape: f32[8,4], index: 1, kind: input, shape index: {}]
  %s2 = inlined_call_operand.vmem [shape: f32[64,8], index: 2, kind: input, shape index: {}]
  %s3 = inlined_call_operand.vmem [shape: f32[1,8], index: 3, kind: input, shape index: {}]
  %s4 = inlined_call_operand.hbm [shape: f32[8,12], index: 4, kind: output, shape index: {}]
  %s5 = sld [smem:[#allocation0]]
  $region26: #{tpu_custom_call.1} parent=0
    _
  %s7 = ssub.s32 1, %s5
  %s8 = scalar_select 0, %s7, %s5
  $region1: #{tpu_custom_call.1} parent=0
    #allocation2 [shape = 'u8[4096]{0}', space=vmem, size = 0x1000, scoped, tag = 'output window, operand 0, single buffered']
    #allocation3 [shape = 's32[1]{0}', space=sflag, size = 0x4, scoped, tag = 'scoped memory for tpu_custom_call.1']
    %9 = vsyncpa [#allocation3], 0
    // Predicated region
    $region2: #{tpu_custom_call.1} parent=1 // pred_check
      _
    $region3: #{tpu_custom_call.1} parent=1 // pred_check_branch
      %11 = sbr.rel (0) target = $region5
    $region4: #{tpu_custom_call.1} parent=1 // pred_region
      _
    $region5: #{tpu_custom_call.1} parent=1 // pred_fallthru
      _
    // Predicated region
    $region6: #{tpu_custom_call.1} parent=1 // pred_check
      _
    $region7: #{tpu_custom_call.1} parent=1 // pred_check_branch
      %13 = sbr.rel (0) target = $region9
    $region8: #{tpu_custom_call.1} parent=1 // pred_region
      _
    $region9: #{tpu_custom_call.1} parent=1 // pred_fallthru
      _
    // Predicated region
    $region10: #{tpu_custom_call.1} parent=1 // pred_check
      _
    $region11: #{tpu_custom_call.1} parent=1 // pred_check_branch
      %15 = sbr.rel (0) target = $region13
    $region12: #{tpu_custom_call.1} parent=1 // pred_region
      _
    $region13: #{tpu_custom_call.1} parent=1 // pred_fallthru
      _
    // Predicated region
    $region14: #{tpu_custom_call.1} parent=1 // pred_check
      _
    $region15: #{tpu_custom_call.1} parent=1 // pred_check_branch
      %17 = sbr.rel (0) target = $region17
    $region16: #{tpu_custom_call.1} parent=1 // pred_region
      _
    $region17: #{tpu_custom_call.1} parent=1 // pred_fallthru
      _
    %v18 = vld [vmem:[%s0] sm:$0xff]
    %v19 = vld [vmem:[%s2] sm:$0xff]
    %v20 = vld [vmem:[%s2 + $0x8] sm:$0xff]
    %v21 = vld [vmem:[%s2 + $0x10] sm:$0xff]
    %v22 = vld [vmem:[%s2 + $0x18] sm:$0xff]
    %v23 = vld [vmem:[%s2 + $0x20] sm:$0xff]
    %v24 = vld [vmem:[%s2 + $0x28] sm:$0xff]
    %v25 = vld [vmem:[%s2 + $0x30] sm:$0xff]
    %v26 = vld [vmem:[%s2 + $0x38] sm:$0xff]
    %v27 = vld [vmem:[%s3] sm:$0x1]
    %v29 = vlaneseq
    %v30 = vshrl.u32 %v29, 7
    %v31 = vsub.s32 0, %v30
    %v32 = vrot.slane %v27, %v31
    %vm34 = vcmask 523264
    %v36 = vsel %vm34, %v18, 0
    %38 = vmatprep.subr.mxu0 0.0
    %39 = vmatpush1.msra.mxu0 0.0
    %40 = vmatprep.subr.mxu0 0.0
    %41 = vmatpush1.msra.mxu0 0.0
    %42 = vmatprep.subr.mxu0 0.0
    %43 = vmatpush1.msra.mxu0 0.0
    %44 = vmatprep.subr.mxu0 0.0
    %45 = vmatpush1.msra.mxu0 0.0
    %46 = vmatprep.subr.mxu0 0.0
    %47 = vmatpush1.msra.mxu0 0.0
    %48 = vmatprep.subr.mxu0 0.0
    %49 = vmatpush1.msra.mxu0 0.0
    %50 = vmatprep.subr.mxu0 0.0
    %51 = vmatpush1.msra.mxu0 0.0
    %52 = vmatprep.subr.mxu0 0.0
    %53 = vmatpush1.msra.mxu0 0.0
    %54 = vmatprep.subr.mxu0 0.0
    %55 = vmatpush1.msra.mxu0 %v26
    %56 = vmatprep.subr.mxu0 0.0
    %57 = vmatpush1.msra.mxu0 %v25
    %58 = vmatprep.subr.mxu0 0.0
    %59 = vmatpush1.msra.mxu0 %v24
    %60 = vmatprep.subr.mxu0 0.0
    %61 = vmatpush1.msra.mxu0 %v23
    %62 = vmatprep.subr.mxu0 0.0
    %63 = vmatpush1.msra.mxu0 %v22
    %64 = vmatprep.subr.mxu0 0.0
    %65 = vmatpush1.msra.mxu0 %v21
    %66 = vmatprep.subr.mxu0 0.0
    %67 = vmatpush1.msra.mxu0 %v20
    %68 = vmatprep.subr.mxu0 0.0
    %69 = vmatpush1.msra.mxu0 %v19
    %70 = vmatprep.subr.mxu0 0.0
    %71 = vmatpush2.msra.mxu0 0.0
    %72 = vmatprep.subr.mxu0 0.0
    %73 = vmatpush2.msra.mxu0 0.0
    %74 = vmatprep.subr.mxu0 0.0
    %75 = vmatpush2.msra.mxu0 0.0
    %76 = vmatprep.subr.mxu0 0.0
    %77 = vmatpush2.msra.mxu0 0.0
    %78 = vmatprep.subr.mxu0 0.0
    %79 = vmatpush2.msra.mxu0 0.0
    %80 = vmatprep.subr.mxu0 0.0
    %81 = vmatpush2.msra.mxu0 0.0
    %82 = vmatprep.subr.mxu0 0.0
    %83 = vmatpush2.msra.mxu0 0.0
    %84 = vmatprep.subr.mxu0 0.0
    %85 = vmatpush2.msra.mxu0 0.0
    %86 = vmatprep.subr.mxu0 0.0
    %87 = vmatpush2.msra.mxu0 0.0
    %88 = vmatprep.subr.mxu0 0.0
    %89 = vmatpush2.msra.mxu0 0.0
    %90 = vmatprep.subr.mxu0 0.0
    %91 = vmatpush2.msra.mxu0 0.0
    %92 = vmatprep.subr.mxu0 0.0
    %93 = vmatpush2.msra.mxu0 0.0
    %94 = vmatprep.subr.mxu0 0.0
    %95 = vmatpush2.msra.mxu0 0.0
    %96 = vmatprep.subr.mxu0 0.0
    %97 = vmatpush2.msra.mxu0 0.0
    %98 = vmatprep.subr.mxu0 0.0
    %99 = vmatpush2.msra.mxu0 0.0
    %100 = vmatprep.subr.mxu0 0.0
    %101 = vmatpush2.msra.mxu0 0.0
    %102 = vmatprep.mubr.f32.mxu0 0.0
    %103 = vmatmul.mubr.f32.gmra.mxu0 %v36
    %v104 = vpop.f32.mrf.mxu0
    %v105 = vadd.f32 %v32, %v104
    %v106 = vpop.f32.mrf.mxu0
    %107 = vdwg.mxu0
    %v108 = vld [vmem:[%s1] sm:$0xff]
    %v109 = vmax.f32 %v105, 0.0
    %vm110 = vcmp.ne.f32.partialorder %v105, %v105
    %v111 = vadd.f32 %v105, 0.0
    %v112 = vand.u32 2147483647, %v105
    %v113 = vsub.f32 0.0, %v112
    %v114 = vmul.f32 %v113, 1.442695
    %v115 = vpow.pop %v114
    %v116 = vadd.f32 %v115, 1.0
    %v117 = vlog2.pop %v116
    %v118 = vmul.f32 %v117, 0.6931472
    %v119 = vmul.f32 -0.5, %v115
    %v120 = vadd.f32 %v119, 1.0
    %v121 = vmul.f32 %v120, %v115
    %v122 = vand.u32 2147483647, %v115
    %vm123 = vcmp.lt.f32.partialorder %v122, 0.0004427343
    %v124 = vsel %vm123, %v121, %v118
    %v125 = vadd.f32 %v109, %v124
    %v126 = vsel %vm110, %v111, %v125
    %v127 = vadd.f32 %v126, 0.0001
    %v128 = vrsqrt.pop %v127
    %v129 = vmul.f32 %v127, %v128
    %vm130 = vcmp.eq.f32.partialorder %v127, inf
    %v131 = vsel %vm130, %v127, %v129
    %vm132 = vcmp.eq.f32.partialorder %v127, 0.0
    %v133 = vand.u32 %v127, 2147483648
    %v134 = vsel %vm132, %v133, %v131
    %136 = vrot.lane.b32.xlu0 %v134, 124
    %v137 = vpop.permute.xlu0 %136
    %v139 = vmul.f32 %v108, %v137
    %v140 = vadd.f32 %v139, %v105
    %142 = vrot.lane.b32.xlu0 %v105, 4
    %v143 = vpop.permute.xlu0 %142
    %146 = vrot.lane.b32.xlu0 %v127, 4
    %v147 = vpop.permute.xlu0 %146
    %vm149 = vcmask 31744
    %v150 = vsel %vm149, %v140, %v143
    %vm151 = vcmask 64512
    %v152 = vsel %vm151, %v150, %v147
    %vm153 = vcmask 97280
    %154 = vst.msk [vmem:[#allocation2] sm:$0xff] %vm153, %v152
    // Predicated region
    $region18: #{tpu_custom_call.1} parent=1 // pred_check
      _
    $region19: #{tpu_custom_call.1} parent=1 // pred_check_branch
      %156 = sbr.rel (0) target = $region21
    $region20: #{tpu_custom_call.1} parent=1 // pred_region
      %s158 = ssub.s32 128, 128
      %159 = vsyncadd [#allocation3], %s158
      %s161 = sshll.u32 [#allocation2], 4
      %s162 = int_to_ptr.vmem [resolvable:$true] %s161
      %164 = dma.vmem_to_hbm [thread:$0]  %s162, 128, %s4, [#allocation3]
    $region21: #{tpu_custom_call.1} parent=1 // pred_fallthru
      _
    // Predicated region
    $region22: #{tpu_custom_call.1} parent=1 // pred_check
      _
    $region23: #{tpu_custom_call.1} parent=1 // pred_check_branch
      %166 = sbr.rel (0) target = $region25
    $region24: #{tpu_custom_call.1} parent=1 // pred_region
      %167 = dma.done [#allocation3], 128
    $region25: #{tpu_custom_call.1} parent=1 // pred_fallthru
      _
    %168 = vsyncpa [#allocation3], 1

</llo_original>
